<compile_context>
chip_gen: v5e
topology: v5e:2x2
jax: 0.10.0
libtpu: 0.0.40
codegen_flags: <defaults>
</compile_context>

<pallas_src>
import jax
import jax.numpy as jnp
from jax.experimental import pallas as pl
from jax.experimental.pallas import tpu as pltpu

EPS = 1e-5

# VMEM budget reserved for the streaming tiles (input + output, double-buffered).
# 24 MiB fits comfortably inside the scoped limits / physical VMEM of v5e, v6e and
# v7x (64 MiB per TC) while still allowing >=512-row tiles for any realistic ndim.
_TILE_VMEM_BUDGET = 24 << 20
_VMEM_LIMIT_BYTES = 32 << 20


# -------------------- Pallas kernels --------------------

def _layernorm_bias_kernel(x_ref, w_ref, b_ref, o_ref):
    x = x_ref[...].astype(jnp.float32)                        # (block_rows, ndim) -> f32 in VMEM
    inv_n = 1.0 / x.shape[-1]                                 # compile-time constant
    mean = jnp.sum(x, axis=-1, keepdims=True) * inv_n         # XLU reduce + VPU mul
    xc = x - mean
    var = jnp.sum(xc * xc, axis=-1, keepdims=True) * inv_n    # biased variance (matches F.layer_norm)
    inv_std = jax.lax.rsqrt(var + EPS)                        # EUP rsqrt (free VLIW slot)
    w = w_ref[...].astype(jnp.float32)                        # (1, ndim), resident across grid
    b = b_ref[...].astype(jnp.float32)
    o_ref[...] = (xc * inv_std * w + b).astype(o_ref.dtype)


def _layernorm_nobias_kernel(x_ref, w_ref, o_ref):
    x = x_ref[...].astype(jnp.float32)
    inv_n = 1.0 / x.shape[-1]
    mean = jnp.sum(x, axis=-1, keepdims=True) * inv_n
    xc = x - mean
    var = jnp.sum(xc * xc, axis=-1, keepdims=True) * inv_n
    inv_std = jax.lax.rsqrt(var + EPS)
    w = w_ref[...].astype(jnp.float32)
    o_ref[...] = (xc * inv_std * w).astype(o_ref.dtype)


# -------------------- tiling helper --------------------

def _pick_block_rows(rows, ndim, itemsize, budget_bytes=_TILE_VMEM_BUDGET):
    """Largest row tile that fits the VMEM budget (2x double-buffered in + 2x out)."""
    per_row = 4 * ndim * itemsize
    max_rows_by_vmem = max(8, budget_bytes // per_row)
    if rows <= min(1024, max_rows_by_vmem):
        # Single full-extent block: no divisibility constraint, no per-step overhead.
        return rows
    block_rows = min(1024, max_rows_by_vmem, rows)
    return max(8, (block_rows // 8) * 8)                      # multiple of 8 (sublane)


# -------------------- wrapper --------------------

def layer_norm(x, weight, bias=None):
    """LayerNorm over the last dim of x; weight: (ndim,), bias: (ndim,) or None."""
    orig_shape = x.shape
    ndim = weight.shape[0]
    assert orig_shape[-1] == ndim, "last dim of x must equal weight size"

    x2d = x.reshape(-1, ndim)                                 # keep original dtype in HBM
    rows = x2d.shape[0]
    w2d = weight.reshape(1, ndim)

    itemsize = jnp.dtype(x2d.dtype).itemsize
    block_rows = _pick_block_rows(rows, ndim, itemsize)
    grid = (pl.cdiv(rows, block_rows),)

    x_spec = pl.BlockSpec((block_rows, ndim), lambda i: (i, 0))
    param_spec = pl.BlockSpec((1, ndim), lambda i: (0, 0))    # resident, never re-fetched
    out_spec = pl.BlockSpec((block_rows, ndim), lambda i: (i, 0))
    out_sd = jax.ShapeDtypeStruct(x2d.shape, x2d.dtype)

    param_bytes = ndim * jnp.dtype(weight.dtype).itemsize * (2 if bias is not None else 1)
    cost = pl.CostEstimate(
        flops=7 * rows * ndim,
        transcendentals=rows,
        bytes_accessed=2 * rows * ndim * itemsize + param_bytes,
    )
    cparams = pltpu.CompilerParams(
        dimension_semantics=("parallel",),                    # lets v7x shard rows over 2 TCs
        vmem_limit_bytes=_VMEM_LIMIT_BYTES,
    )

    if bias is not None:
        b2d = bias.reshape(1, ndim)
        out = pl.pallas_call(
            _layernorm_bias_kernel,
            out_shape=out_sd,
            grid=grid,
            in_specs=[x_spec, param_spec, param_spec],
            out_specs=out_spec,
            compiler_params=cparams,
            cost_estimate=cost,
        )(x2d, w2d, b2d)
    else:
        out = pl.pallas_call(
            _layernorm_nobias_kernel,
            out_shape=out_sd,
            grid=grid,
            in_specs=[x_spec, param_spec],
            out_specs=out_spec,
            compiler_params=cparams,
            cost_estimate=cost,
        )(x2d, w2d)

    return out.reshape(orig_shape)


# -------------------- pure-JAX reference (mirrors F.layer_norm) --------------------

def reference_layer_norm(x, weight, bias=None):
    xf = x.astype(jnp.float32)
    mean = jnp.mean(xf, axis=-1, keepdims=True)
    var = jnp.mean((xf - mean) ** 2, axis=-1, keepdims=True)
    y = (xf - mean) / jnp.sqrt(var + EPS)
    y = y * weight.astype(jnp.float32)
    if bias is not None:
        y = y + bias.astype(jnp.float32)
    return y.astype(x.dtype)


# -------------------- main --------------------

if __name__ == "__main__":
    B, S, E = 2, 8, 32                                        # small transformer-ish shapes
    key = jax.random.PRNGKey(0)
    kx, kw, kb = jax.random.split(key, 3)

    x = jax.random.normal(kx, (B, S, E), jnp.float32)
    weight = 1.0 + 0.1 * jax.random.normal(kw, (E,), jnp.float32)
    bias = 0.1 * jax.random.normal(kb, (E,), jnp.float32)

    # bias=True path
    out = layer_norm(x, weight, bias)
    out = jax.block_until_ready(out)
    ref = reference_layer_norm(x, weight, bias)
    err = float(jnp.max(jnp.abs(out - ref)))
    assert jnp.allclose(out, ref, rtol=1e-5, atol=1e-5), f"bias=True max abs err = {err}"

    # bias=False path (LayerNorm's optional-bias variant)
    out_nb = layer_norm(x, weight, None)
    out_nb = jax.block_until_ready(out_nb)
    ref_nb = reference_layer_norm(x, weight, None)
    err_nb = float(jnp.max(jnp.abs(out_nb - ref_nb)))
    assert jnp.allclose(out_nb, ref_nb, rtol=1e-5, atol=1e-5), f"bias=False max abs err = {err_nb}"

    # bf16 input path (casts happen inside the kernel, I/O stays bf16)
    xb = x.astype(jnp.bfloat16)
    out_bf = jax.block_until_ready(layer_norm(xb, weight, bias))
    ref_bf = reference_layer_norm(xb, weight, bias)
    assert out_bf.dtype == jnp.bfloat16
    assert jnp.allclose(out_bf.astype(jnp.float32), ref_bf.astype(jnp.float32),
                        rtol=2e-2, atol=2e-2), "bf16 path mismatch"

    # row-tiled path (rows > block budget triggers the grid; tail block is padded)
    x_big = jax.random.normal(kx, (2056, 256), jnp.float32)   # 2056 % 8 == 0? no matter: tail padded
    w_big = 1.0 + 0.1 * jax.random.normal(kw, (256,), jnp.float32)
    b_big = 0.1 * jax.random.normal(kb, (256,), jnp.float32)
    out_big = jax.block_until_ready(layer_norm(x_big, w_big, b_big))
    ref_big = reference_layer_norm(x_big, w_big, b_big)
    assert jnp.allclose(out_big, ref_big, rtol=1e-5, atol=1e-5), "tiled path mismatch"

    print("KERNEL_OK")
</pallas_src>

<mosaic_0001>
module attributes {stable_mosaic.version = 11 : i64} {
  func.func @_layernorm_bias_kernel(%arg0: i32, %arg1: memref<16x32xf32, #tpu.memory_space<vmem>>, %arg2: memref<1x32xf32, #tpu.memory_space<vmem>>, %arg3: memref<1x32xf32, #tpu.memory_space<vmem>>, %arg4: memref<16x32xf32, #tpu.memory_space<vmem>>) attributes {dimension_semantics = [#tpu.dimension_semantics<parallel>], iteration_bounds = array<i64: 1>, scalar_prefetch = 0 : i64, scratch_operands = 0 : i64, tpu.core_type = #tpu.core_type<tc>, window_params = [{transform_indices = @transform_0, window_bounds = array<i64: 16, 32>}, {pipeline_mode = #tpu.pipeline_mode<synchronous>, transform_indices = @transform_1, window_bounds = array<i64: 1, 32>}, {pipeline_mode = #tpu.pipeline_mode<synchronous>, transform_indices = @transform_2, window_bounds = array<i64: 1, 32>}, {transform_indices = @transform_3, window_bounds = array<i64: 16, 32>}]} {
    %c0 = arith.constant 0 : index
    %c0_0 = arith.constant 0 : index
    %0 = vector.load %arg1[%c0, %c0_0] : memref<16x32xf32, #tpu.memory_space<vmem>>, vector<16x32xf32>
    %cst = arith.constant dense<0.000000e+00> : vector<16xf32>
    %1 = vector.multi_reduction <add>, %0, %cst [1] : vector<16x32xf32> to vector<16xf32>
    %2 = vector.shape_cast %1 : vector<16xf32> to vector<16x1xf32>
    %cst_1 = arith.constant 3.125000e-02 : f32
    %3 = vector.broadcast %cst_1 : f32 to vector<16x1xf32>
    %4 = arith.mulf %2, %3 : vector<16x1xf32>
    %5 = vector.broadcast %4 : vector<16x1xf32> to vector<16x32xf32>
    %6 = arith.subf %0, %5 : vector<16x32xf32>
    %7 = arith.mulf %6, %6 : vector<16x32xf32>
    %cst_2 = arith.constant dense<0.000000e+00> : vector<16xf32>
    %8 = vector.multi_reduction <add>, %7, %cst_2 [1] : vector<16x32xf32> to vector<16xf32>
    %9 = vector.shape_cast %8 : vector<16xf32> to vector<16x1xf32>
    %cst_3 = arith.constant 3.125000e-02 : f32
    %10 = vector.broadcast %cst_3 : f32 to vector<16x1xf32>
    %11 = arith.mulf %9, %10 : vector<16x1xf32>
    %cst_4 = arith.constant 9.99999974E-6 : f32
    %12 = vector.broadcast %cst_4 : f32 to vector<16x1xf32>
    %13 = arith.addf %11, %12 : vector<16x1xf32>
    %14 = math.rsqrt %13 : vector<16x1xf32>
    %c0_5 = arith.constant 0 : index
    %c0_6 = arith.constant 0 : index
    %15 = vector.load %arg2[%c0_5, %c0_6] : memref<1x32xf32, #tpu.memory_space<vmem>>, vector<1x32xf32>
    %c0_7 = arith.constant 0 : index
    %c0_8 = arith.constant 0 : index
    %16 = vector.load %arg3[%c0_7, %c0_8] : memref<1x32xf32, #tpu.memory_space<vmem>>, vector<1x32xf32>
    %17 = vector.broadcast %14 : vector<16x1xf32> to vector<16x32xf32>
    %18 = arith.mulf %6, %17 : vector<16x32xf32>
    %19 = vector.broadcast %15 : vector<1x32xf32> to vector<16x32xf32>
    %20 = arith.mulf %18, %19 : vector<16x32xf32>
    %21 = vector.broadcast %16 : vector<1x32xf32> to vector<16x32xf32>
    %22 = arith.addf %20, %21 : vector<16x32xf32>
    %c0_9 = arith.constant 0 : index
    %c0_10 = arith.constant 0 : index
    %23 = vector.load %arg4[%c0_9, %c0_10] : memref<16x32xf32, #tpu.memory_space<vmem>>, vector<16x32xf32>
    tpu.vector_store %arg4[%c0_9, %c0_10], %22 {strides = array<i32>} : memref<16x32xf32, #tpu.memory_space<vmem>>, vector<16x32xf32>,
    return
  }
  func.func @transform_0(%arg0: i32) -> (i32, i32) {
    %c0_i32 = arith.constant 0 : i32
    %c0_i32_0 = arith.constant 0 : i32
    return %arg0, %c0_i32 : i32, i32
  }
  func.func @transform_1(%arg0: i32) -> (i32, i32) {
    %c0_i32 = arith.constant 0 : i32
    %c0_i32_0 = arith.constant 0 : i32
    %c0_i32_1 = arith.constant 0 : i32
    return %c0_i32, %c0_i32_0 : i32, i32
  }
  func.func @transform_2(%arg0: i32) -> (i32, i32) {
    %c0_i32 = arith.constant 0 : i32
    %c0_i32_0 = arith.constant 0 : i32
    %c0_i32_1 = arith.constant 0 : i32
    return %c0_i32, %c0_i32_0 : i32, i32
  }
  func.func @transform_3(%arg0: i32) -> (i32, i32) {
    %c0_i32 = arith.constant 0 : i32
    %c0_i32_0 = arith.constant 0 : i32
    return %arg0, %c0_i32 : i32, i32
  }
}

</mosaic_0001>

<llo_original>
// kernel: tpu_custom_call.1
$region0: #{tpu_custom_call.1}
  #allocation0 [shape = 'u32[]', space=smem, size = 0x4, offset = 0x4, fixed_abs, tag = 'smem constant byte address 0x4 - core index']
  #allocation1 [shape = 'u32[72,128]{1,0:T(1,128)}', space=vmem, size = 0x9000, scoped, tag = 'internal scratch']
  %s0 = inlined_call_operand.hbm [shape: f32[16,32], index: 0, kind: input, shape index: {}]
  %s1 = inlined_call_operand.hbm [shape: f32[1,32], index: 1, kind: input, shape index: {}]
  %s2 = inlined_call_operand.vmem [shape: f32[1,32], index: 2, kind: input, shape index: {}]
  %s3 = inlined_call_operand.hbm [shape: f32[16,32], index: 3, kind: output, shape index: {}]
  %s4 = sld [smem:[#allocation0]]
  $region30: #{tpu_custom_call.1} parent=0
    _
  %s6 = ssub.s32 1, %s4
  %s7 = scalar_select 0, %s6, %s4
  $region1: #{tpu_custom_call.1} parent=0
    #allocation2 [shape = 'u8[8192]{0}', space=vmem, size = 0x2000, scoped, tag = 'input window, operand 0, single buffered']
    #allocation3 [shape = 's32[1]{0}', space=sflag, size = 0x4, scoped, tag = 'scoped memory for tpu_custom_call.1']
    #allocation4 [shape = 's32[1]{0}', space=sflag, size = 0x4, scoped, tag = 'scoped memory for tpu_custom_call.1']
    #allocation5 [shape = 'u8[512]{0}', space=vmem, size = 0x400, scoped, tag = 'input window, operand 1, single buffered']
    #allocation6 [shape = 's32[1]{0}', space=sflag, size = 0x4, scoped, tag = 'scoped memory for tpu_custom_call.1']
    #allocation7 [shape = 'u8[8192]{0}', space=vmem, size = 0x2000, scoped, tag = 'output window, operand 0, single buffered']
    %8 = vsyncpa [#allocation3], 0
    %9 = vsyncpa [#allocation6], 0
    %10 = vsyncpa [#allocation4], 0
    // Predicated region
    $region2: #{tpu_custom_call.1} parent=1 // pred_check
      _
    $region3: #{tpu_custom_call.1} parent=1 // pred_check_branch
      %12 = sbr.rel (0) target = $region5
    $region4: #{tpu_custom_call.1} parent=1 // pred_region
      %14 = vsyncadd [#allocation3], 0
      %s15 = sshll.u32 %s0, 4
      %s16 = int_to_ptr.hbm [resolvable:$true] %s15
      %s17 = sshll.u32 [#allocation2], 4
      %s18 = int_to_ptr.vmem [resolvable:$true] %s17
      %23 = dma.hbm_to_vmem [thread:$0]  %s16, 256, %s18, [#allocation3], 128, 128, 8
    $region5: #{tpu_custom_call.1} parent=1 // pred_fallthru
      _
    // Predicated region
    $region6: #{tpu_custom_call.1} parent=1 // pred_check
      _
    $region7: #{tpu_custom_call.1} parent=1 // pred_check_branch
      %25 = sbr.rel (0) target = $region9
    $region8: #{tpu_custom_call.1} parent=1 // pred_region
      %27 = vsyncadd [#allocation6], 0
      %s29 = sshll.u32 %s1, 4
      %s30 = int_to_ptr.hbm [resolvable:$true] %s29
      %s31 = sshll.u32 [#allocation5], 4
      %s32 = int_to_ptr.vmem [resolvable:$true] %s31
      %34 = dma.hbm_to_vmem [thread:$0]  %s30, 16, %s32, [#allocation6]
    $region9: #{tpu_custom_call.1} parent=1 // pred_fallthru
      _
    // Predicated region
    $region10: #{tpu_custom_call.1} parent=1 // pred_check
      _
    $region11: #{tpu_custom_call.1} parent=1 // pred_check_branch
      %36 = sbr.rel (0) target = $region13
    $region12: #{tpu_custom_call.1} parent=1 // pred_region
      _
    $region13: #{tpu_custom_call.1} parent=1 // pred_fallthru
      _
    // Predicated region
    $region14: #{tpu_custom_call.1} parent=1 // pred_check
      _
    $region15: #{tpu_custom_call.1} parent=1 // pred_check_branch
      %38 = sbr.rel (0) target = $region17
    $region16: #{tpu_custom_call.1} parent=1 // pred_region
      %40 = dma.done [#allocation3], 256
    $region17: #{tpu_custom_call.1} parent=1 // pred_fallthru
      _
    // Predicated region
    $region18: #{tpu_custom_call.1} parent=1 // pred_check
      _
    $region19: #{tpu_custom_call.1} parent=1 // pred_check_branch
      %42 = sbr.rel (0) target = $region21
    $region20: #{tpu_custom_call.1} parent=1 // pred_region
      %44 = dma.done [#allocation6], 16
    $region21: #{tpu_custom_call.1} parent=1 // pred_fallthru
      _
    %v45 = vld [vmem:[#allocation2] sm:$0xff]
    %v46 = vld [vmem:[#allocation2 + $0x8] sm:$0xff]
    %vm47 = vcmask 261120
    %v48 = vsel %vm47, %v45, 0.0
    %49 = vadd.xlane.f32.xlu0 %v48
    %v50 = vpop.xlane.xlu0 %49
    %v51 = vsel %vm47, %v46, 0.0
    %52 = vadd.xlane.f32.xlu0 %v51
    %v53 = vpop.xlane.xlu0 %52
    %v54 = vmul.f32 %v50, 0.03125
    %v55 = vmul.f32 %v53, 0.03125
    %v56 = vsub.f32 %v45, %v54
    %v57 = vsub.f32 %v46, %v55
    %v58 = vmul.f32 %v56, %v56
    %v59 = vmul.f32 %v57, %v57
    %v60 = vsel %vm47, %v58, 0.0
    %61 = vadd.xlane.f32.xlu0 %v60
    %v62 = vpop.xlane.xlu0 %61
    %v63 = vsel %vm47, %v59, 0.0
    %64 = vadd.xlane.f32.xlu0 %v63
    %v65 = vpop.xlane.xlu0 %64
    %v66 = vmul.f32 %v62, 0.03125
    %v67 = vmul.f32 %v65, 0.03125
    %v68 = vadd.f32 %v66, 1e-05
    %v69 = vadd.f32 %v67, 1e-05
    %v70 = vrsqrt.pop %v68
    %v71 = vmul.f32 %v70, %v68
    %v72 = vmul.f32 %v71, %v70
    %v73 = vmul.f32 0.5, %v72
    %v74 = vsub.f32 1.5, %v73
    %v75 = vmul.f32 %v70, %v74
    %vm76 = vweird.f32 %v68
    %vm77 = vweird.f32 %v70
    %vm78 = vmor %vm76, %vm77
    %v79 = vsel %vm78, %v70, %v75
    %v80 = vrsqrt.pop %v69
    %v81 = vmul.f32 %v80, %v69
    %v82 = vmul.f32 %v81, %v80
    %v83 = vmul.f32 0.5, %v82
    %v84 = vsub.f32 1.5, %v83
    %v85 = vmul.f32 %v80, %v84
    %vm86 = vweird.f32 %v69
    %vm87 = vweird.f32 %v80
    %vm88 = vmor %vm86, %vm87
    %v89 = vsel %vm88, %v80, %v85
    %v90 = vld [vmem:[#allocation5] sm:$0x1]
    %v91 = vld [vmem:[%s2] sm:$0x1]
    %v92 = vmul.f32 %v56, %v79
    %v93 = vmul.f32 %v57, %v89
    %v95 = vperm.slane %v90, 0
    %v97 = vmul.f32 %v92, %v95
    %v98 = vmul.f32 %v93, %v95
    %v100 = vperm.slane %v91, 0
    %v102 = vadd.f32 %v97, %v100
    %v103 = vadd.f32 %v98, %v100
    %104 = vst.msk [vmem:[#allocation7] sm:$0xff] %vm47, %v102
    %105 = vst.msk [vmem:[#allocation7 + $0x8] sm:$0xff] %vm47, %v103
    // Predicated region
    $region22: #{tpu_custom_call.1} parent=1 // pred_check
      _
    $region23: #{tpu_custom_call.1} parent=1 // pred_check_branch
      %107 = sbr.rel (0) target = $region25
    $region24: #{tpu_custom_call.1} parent=1 // pred_region
      %109 = vsyncadd [#allocation4], 0
      %s110 = sshll.u32 [#allocation7], 4
      %s111 = int_to_ptr.vmem [resolvable:$true] %s110
      %s112 = sshll.u32 %s3, 4
      %s113 = int_to_ptr.hbm [resolvable:$true] %s112
      %118 = dma.vmem_to_hbm [thread:$0]  %s111, 256, %s113, [#allocation4], 128, 128, 8
    $region25: #{tpu_custom_call.1} parent=1 // pred_fallthru
      _
    // Predicated region
    $region26: #{tpu_custom_call.1} parent=1 // pred_check
      _
    $region27: #{tpu_custom_call.1} parent=1 // pred_check_branch
      %120 = sbr.rel (0) target = $region29
    $region28: #{tpu_custom_call.1} parent=1 // pred_region
      %122 = dma.done [#allocation4], 256
    $region29: #{tpu_custom_call.1} parent=1 // pred_fallthru
      _
    %123 = vsyncpa [#allocation3], 1
    %124 = vsyncpa [#allocation6], 1
    %125 = vsyncpa [#allocation4], 1

</llo_original>
